<compile_context>
chip_gen: v7x
topology: tpu7x:2x2x1
jax: 0.10.0
libtpu: 0.0.40
codegen_flags: <defaults>
</compile_context>

<pallas_src>
import math

import jax
import jax.numpy as jnp
from jax.experimental import pallas as pl
from jax.experimental.pallas import tpu as pltpu

LN_EPS = 1e-5     # PyTorch nn.LayerNorm default eps
L2_EPS = 1e-8     # l2norm eps
NEG_INF = -1e30   # mask value outside a batch segment (exp underflows to 0)


def _round_up(x, m):
    return (x + m - 1) // m * m


def _ln_tanh(y, gamma, beta):
    """LayerNorm over the last dim (biased variance, single pass) then tanh."""
    mean = jnp.mean(y, axis=-1, keepdims=True)
    var = jnp.maximum(jnp.mean(y * y, axis=-1, keepdims=True) - mean * mean, 0.0)
    return jnp.tanh((y - mean) * jax.lax.rsqrt(var + LN_EPS) * gamma + beta)


# --------------------------------------------------------------------------- #
# Kernel
# --------------------------------------------------------------------------- #
def visual_sa_kernel(local_ref, gw_ref, wl_ref, bl_ref, gl_ref, betal_ref, out_ref):
    m, _ = local_ref.shape            # m = tile_b * num_region (flattened rows)
    tb = gw_ref.shape[0]              # images in this tile
    r = m // tb                       # regions per image (static)
    cdt = wl_ref.dtype                # matmul compute dtype (bf16 by default)

    x = local_ref[...]                # (M, D), f32 or bf16
    x_c = x.astype(cdt)

    # Local embedding: Linear -> LayerNorm -> Tanh.  One (M, D) @ (D, D) MXU
    # matmul per step with f32 accumulation; LN/tanh stay f32 on the VPU/EUP.
    y = jnp.dot(x_c, wl_ref[...], preferred_element_type=jnp.float32) + bl_ref[...]
    mean = jnp.mean(y, axis=-1, keepdims=True)
    var = jnp.maximum(jnp.mean(y * y, axis=-1, keepdims=True) - mean * mean, 0.0)
    l_emb = jnp.tanh((y - mean) * jax.lax.rsqrt(var + LN_EPS)
                     * gl_ref[...] + betal_ref[...])                     # (M, D) f32

    # logits[b, i] = <g_emb[b] * wc, l_emb[i]>  (only row b's own region columns
    # are kept).  (TB, D) x (D, M): ~TB/D extra MXU work vs. the main matmul.
    logits = jax.lax.dot_general(
        gw_ref[...].astype(cdt), l_emb.astype(cdt),
        (((1,), (1,)), ((), ())),                                        # 'td,md->tm'
        preferred_element_type=jnp.float32)                              # (TB, M)

    # Segment mask: image b owns flattened region rows [b*r, (b+1)*r).
    row = jax.lax.broadcasted_iota(jnp.int32, (tb, m), 0)                # image id
    col = jax.lax.broadcasted_iota(jnp.int32, (tb, m), 1)                # region row
    lo = row * r
    seg = (col >= lo) & (col < lo + r)

    # Per-image softmax over its R region logits (masked, lane-axis reduce).
    logits = jnp.where(seg, logits, NEG_INF)
    mx = jnp.max(logits, axis=-1, keepdims=True)                         # (TB, 1)
    e = jnp.exp(logits - mx)                                             # 0 off-segment
    z = jnp.sum(e, axis=-1, keepdims=True)                               # (TB, 1)
    w = e * (1.0 / z)                                                    # (TB, M)

    # new_global[b] = sum_i w[b, i] * local[i]: one (TB, M) x (M, D) MXU dot.
    new_g = jnp.dot(w.astype(cdt), x_c, preferred_element_type=jnp.float32)  # (TB, D)

    # Exact L2 normalisation in f32 (lane-dense (TB, D) output block).
    norm = jnp.sqrt(jnp.sum(new_g * new_g, axis=-1, keepdims=True)) + L2_EPS
    out_ref[...] = new_g / norm


# --------------------------------------------------------------------------- #
# Host-side helpers / wrapper
# --------------------------------------------------------------------------- #
def _global_branch(raw_global, params):
    """g_emb = Tanh(LN(raw_global @ wg + bg)), folded with the Linear(D->1)
    weight -> gw = g_emb * wc.  Tiny (B, D) computation, done once in XLA."""
    g = jnp.dot(raw_global.astype(jnp.float32), params["wg"],
                precision=jax.lax.Precision.HIGHEST,
                preferred_element_type=jnp.float32) + params["bg"][0]
    g_emb = _ln_tanh(g, params["gg"][0], params["betag"][0])
    # embedding_common's bias is uniform over regions -> cancels in softmax(dim=1).
    return g_emb * params["wc"][0]


def _tpu_vmem_capacity():
    cap = 128 * 1024 * 1024
    try:
        cap = int(getattr(pltpu.get_tpu_info(), "vmem_capacity_bytes", cap))
    except Exception:
        pass
    return cap


def _choose_tb(batch, target_tb):
    """Batch tile that avoids padding the batch and keeps every BlockSpec
    (8,128)-legal: tb == batch (blocks equal full array dims) or tb is a
    multiple of 8 dividing batch.  Returns None if no such tile exists."""
    if batch <= target_tb:
        return batch
    t = (target_tb // 8) * 8
    while t >= 8:
        if batch % t == 0:
            return t
        t -= 8
    return None


def visual_sa(local, raw_global, params, *, tb=None, matmul_dtype=jnp.bfloat16):
    B, R, D = local.shape
    cdt = matmul_dtype

    # ---- global branch hoisted out of the kernel (one small XLA matmul) ----
    gw = _global_branch(raw_global, params).astype(jnp.float32)          # (B, D)

    # ---- per-generation batch tile / VMEM budget ----
    vmem_cap = _tpu_vmem_capacity()
    small_vmem = vmem_cap <= 64 * 1024 * 1024          # v7x-like: 64 MiB/TC, 2 TCs
    target_tb = tb if tb is not None else (16 if small_vmem else 32)
    tile_b = _choose_tb(B, target_tb)
    if tile_b is None:
        # Rare fallback (no multiple-of-8 divisor of B <= target): pad the batch.
        tile_b = max(8, (target_tb // 8) * 8)
        b_pad = _round_up(B, tile_b)
    else:
        b_pad = B
    if (small_vmem and b_pad == B and b_pad // tile_b == 1
            and B >= 16 and B % 16 == 0):
        tile_b = B // 2                                # give both TensorCores a step
    vmem_limit = min(vmem_cap * 3 // 4, 96 * 1024 * 1024)

    # Free row-major merge; no HBM copy of `local` on the common (no-pad) path.
    local2 = local.reshape(B * R, D)
    if b_pad != B:
        local2 = jnp.pad(local2, ((0, (b_pad - B) * R), (0, 0)))
        gw = jnp.pad(gw, ((0, b_pad - B), (0, 0)))

    wl = params["wl"].astype(cdt)                      # (D, D) bf16, resident

    out = pl.pallas_call(
        visual_sa_kernel,
        out_shape=jax.ShapeDtypeStruct((b_pad, D), jnp.float32),
        grid=(b_pad // tile_b,),
        in_specs=[
            pl.BlockSpec((tile_b * R, D), lambda b: (b, 0)),   # local (flat rows)
            pl.BlockSpec((tile_b, D), lambda b: (b, 0)),       # g_emb * wc
            pl.BlockSpec((D, D), lambda b: (0, 0)),            # wl
            pl.BlockSpec((1, D), lambda b: (0, 0)),            # bl
            pl.BlockSpec((1, D), lambda b: (0, 0)),            # LN gamma
            pl.BlockSpec((1, D), lambda b: (0, 0)),            # LN beta
        ],
        out_specs=pl.BlockSpec((tile_b, D), lambda b: (b, 0)),
        compiler_params=pltpu.CompilerParams(
            dimension_semantics=(pltpu.PARALLEL,),
            vmem_limit_bytes=vmem_limit),
    )(local2, gw, wl, params["bl"], params["gl"], params["betal"])
    return out if b_pad == B else out[:B]


def make_params(key, embed_dim):
    """Deterministic init matching VisualSA.init_weights semantics."""
    d = embed_dim
    k1, k2, k3 = jax.random.split(key, 3)
    r_dd = math.sqrt(6.0) / math.sqrt(d + d)
    r_d1 = math.sqrt(6.0) / math.sqrt(d + 1)
    return dict(
        # embedding_local: Linear(d,d) stored (in, out); LayerNorm gamma/beta
        wl=jax.random.uniform(k1, (d, d), jnp.float32, -r_dd, r_dd),
        bl=jnp.zeros((1, d), jnp.float32),
        gl=jnp.ones((1, d), jnp.float32),
        betal=jnp.zeros((1, d), jnp.float32),
        # embedding_global
        wg=jax.random.uniform(k2, (d, d), jnp.float32, -r_dd, r_dd),
        bg=jnp.zeros((1, d), jnp.float32),
        gg=jnp.ones((1, d), jnp.float32),
        betag=jnp.zeros((1, d), jnp.float32),
        # embedding_common: Linear(d, 1); bias kept for completeness (cancels in softmax)
        wc=jax.random.uniform(k3, (1, d), jnp.float32, -r_d1, r_d1),
        bc=jnp.zeros((1, 1), jnp.float32),
    )


def visual_sa_reference(local, raw_global, params, *, matmul_dtype=jnp.bfloat16):
    """Pure-JAX reference of VisualSA.forward (eval mode).  With the default
    bf16 matmul dtype it mirrors the kernel numerics; with jnp.float32 it is a
    faithful f32 reference."""
    cdt = matmul_dtype
    f32 = jnp.float32
    hi = jax.lax.Precision.HIGHEST

    gw = _global_branch(raw_global, params)                               # (B, D)
    y = jnp.dot(local.astype(cdt), params["wl"].astype(cdt),
                precision=hi, preferred_element_type=f32) + params["bl"][0]
    l_emb = _ln_tanh(y, params["gl"][0], params["betal"][0])              # (B, R, D)
    logits = jnp.einsum("brd,bd->br", l_emb.astype(cdt), gw.astype(cdt),
                        precision=hi, preferred_element_type=f32)
    weights = jax.nn.softmax(logits, axis=1)                              # (B, R)
    new_g = jnp.einsum("br,brd->bd", weights.astype(cdt), local.astype(cdt),
                       precision=hi, preferred_element_type=f32)
    norm = jnp.sqrt(jnp.sum(new_g * new_g, axis=-1, keepdims=True)) + L2_EPS
    return new_g / norm


def _check(B, R, D, seed, tol_mirror, tol_f32):
    key = jax.random.PRNGKey(seed)
    k_local, k_params = jax.random.split(key)
    local = jax.random.normal(k_local, (B, R, D), jnp.float32)
    raw_global = jnp.mean(local, axis=1)          # raw image = average of regions
    params = make_params(k_params, D)

    out = jax.block_until_ready(visual_sa(local, raw_global, params))
    assert out.shape == (B, D)
    assert bool(jnp.all(jnp.isfinite(out)))

    ref_mirror = visual_sa_reference(local, raw_global, params)
    ref_f32 = visual_sa_reference(local, raw_global, params,
                                  matmul_dtype=jnp.float32)
    err_m = float(jnp.max(jnp.abs(out - ref_mirror)))
    err_f = float(jnp.max(jnp.abs(out - ref_f32)))
    assert err_m < tol_mirror, f"mirror err {err_m} (B={B},R={R},D={D})"
    assert err_f < tol_f32, f"f32 err {err_f} (B={B},R={R},D={D})"


if __name__ == "__main__":
    # Small stand-in for the real (batch, 36, 1024) shapes.
    _check(B=2, R=8, D=32, seed=0, tol_mirror=1e-4, tol_f32=2e-2)
    # Production-like region count (36, not a multiple of 8) + multi-step grid.
    _check(B=48, R=36, D=256, seed=1, tol_mirror=1e-3, tol_f32=3e-2)
    print("KERNEL_OK")
</pallas_src>

<mosaic_0001>
module attributes {stable_mosaic.version = 11 : i64} {
  func.func @visual_sa_kernel(%arg0: i32, %arg1: memref<16x32xf32, #tpu.memory_space<vmem>>, %arg2: memref<2x32xf32, #tpu.memory_space<vmem>>, %arg3: memref<32x32xbf16, #tpu.memory_space<vmem>>, %arg4: memref<1x32xf32, #tpu.memory_space<vmem>>, %arg5: memref<1x32xf32, #tpu.memory_space<vmem>>, %arg6: memref<1x32xf32, #tpu.memory_space<vmem>>, %arg7: memref<2x32xf32, #tpu.memory_space<vmem>>) attributes {dimension_semantics = [#tpu.dimension_semantics<parallel>], iteration_bounds = array<i64: 1>, scalar_prefetch = 0 : i64, scratch_operands = 0 : i64, tpu.core_type = #tpu.core_type<tc>, window_params = [{transform_indices = @transform_0, window_bounds = array<i64: 16, 32>}, {transform_indices = @transform_1, window_bounds = array<i64: 2, 32>}, {pipeline_mode = #tpu.pipeline_mode<synchronous>, transform_indices = @transform_2, window_bounds = array<i64: 32, 32>}, {pipeline_mode = #tpu.pipeline_mode<synchronous>, transform_indices = @transform_3, window_bounds = array<i64: 1, 32>}, {pipeline_mode = #tpu.pipeline_mode<synchronous>, transform_indices = @transform_4, window_bounds = array<i64: 1, 32>}, {pipeline_mode = #tpu.pipeline_mode<synchronous>, transform_indices = @transform_5, window_bounds = array<i64: 1, 32>}, {transform_indices = @transform_6, window_bounds = array<i64: 2, 32>}]} {
    %c0 = arith.constant 0 : index
    %c0_0 = arith.constant 0 : index
    %0 = vector.load %arg1[%c0, %c0_0] : memref<16x32xf32, #tpu.memory_space<vmem>>, vector<16x32xf32>
    %1 = arith.truncf %0 : vector<16x32xf32> to vector<16x32xbf16>
    %c0_1 = arith.constant 0 : index
    %c0_2 = arith.constant 0 : index
    %2 = vector.load %arg3[%c0_1, %c0_2] : memref<32x32xbf16, #tpu.memory_space<vmem>>, vector<32x32xbf16>
    %cst = arith.constant dense<0.000000e+00> : vector<16x32xf32>
    %3 = tpu.matmul %1, %2, %cst {dimension_numbers = #tpu.dot_dimension_numbers<[1], [0], [0], [1], [0, 0, 1, 1], [], []>} : vector<16x32xbf16>, vector<32x32xbf16>, vector<16x32xf32> -> vector<16x32xf32>
    %c0_3 = arith.constant 0 : index
    %c0_4 = arith.constant 0 : index
    %4 = vector.load %arg4[%c0_3, %c0_4] : memref<1x32xf32, #tpu.memory_space<vmem>>, vector<1x32xf32>
    %5 = vector.broadcast %4 : vector<1x32xf32> to vector<16x32xf32>
    %6 = arith.addf %3, %5 : vector<16x32xf32>
    %cst_5 = arith.constant dense<0.000000e+00> : vector<16xf32>
    %7 = vector.multi_reduction <add>, %6, %cst_5 [1] : vector<16x32xf32> to vector<16xf32>
    %8 = vector.shape_cast %7 : vector<16xf32> to vector<16x1xf32>
    %cst_6 = arith.constant 3.200000e+01 : f32
    %9 = vector.broadcast %cst_6 : f32 to vector<16x1xf32>
    %10 = arith.divf %8, %9 : vector<16x1xf32>
    %11 = arith.mulf %6, %6 : vector<16x32xf32>
    %cst_7 = arith.constant dense<0.000000e+00> : vector<16xf32>
    %12 = vector.multi_reduction <add>, %11, %cst_7 [1] : vector<16x32xf32> to vector<16xf32>
    %13 = vector.shape_cast %12 : vector<16xf32> to vector<16x1xf32>
    %cst_8 = arith.constant 3.200000e+01 : f32
    %14 = vector.broadcast %cst_8 : f32 to vector<16x1xf32>
    %15 = arith.divf %13, %14 : vector<16x1xf32>
    %16 = arith.mulf %10, %10 : vector<16x1xf32>
    %17 = arith.subf %15, %16 : vector<16x1xf32>
    %cst_9 = arith.constant 0.000000e+00 : f32
    %18 = vector.broadcast %cst_9 : f32 to vector<16x1xf32>
    %19 = arith.maximumf %17, %18 : vector<16x1xf32>
    %20 = vector.broadcast %10 : vector<16x1xf32> to vector<16x32xf32>
    %21 = arith.subf %6, %20 : vector<16x32xf32>
    %cst_10 = arith.constant 9.99999974E-6 : f32
    %22 = vector.broadcast %cst_10 : f32 to vector<16x1xf32>
    %23 = arith.addf %19, %22 : vector<16x1xf32>
    %24 = math.rsqrt %23 : vector<16x1xf32>
    %25 = vector.broadcast %24 : vector<16x1xf32> to vector<16x32xf32>
    %26 = arith.mulf %21, %25 : vector<16x32xf32>
    %c0_11 = arith.constant 0 : index
    %c0_12 = arith.constant 0 : index
    %27 = vector.load %arg5[%c0_11, %c0_12] : memref<1x32xf32, #tpu.memory_space<vmem>>, vector<1x32xf32>
    %28 = vector.broadcast %27 : vector<1x32xf32> to vector<16x32xf32>
    %29 = arith.mulf %26, %28 : vector<16x32xf32>
    %c0_13 = arith.constant 0 : index
    %c0_14 = arith.constant 0 : index
    %30 = vector.load %arg6[%c0_13, %c0_14] : memref<1x32xf32, #tpu.memory_space<vmem>>, vector<1x32xf32>
    %31 = vector.broadcast %30 : vector<1x32xf32> to vector<16x32xf32>
    %32 = arith.addf %29, %31 : vector<16x32xf32>
    %33 = math.tanh %32 : vector<16x32xf32>
    %c0_15 = arith.constant 0 : index
    %c0_16 = arith.constant 0 : index
    %34 = vector.load %arg2[%c0_15, %c0_16] : memref<2x32xf32, #tpu.memory_space<vmem>>, vector<2x32xf32>
    %35 = arith.truncf %34 : vector<2x32xf32> to vector<2x32xbf16>
    %36 = arith.truncf %33 : vector<16x32xf32> to vector<16x32xbf16>
    %cst_17 = arith.constant dense<0.000000e+00> : vector<2x16xf32>
    %37 = tpu.matmul %35, %36, %cst_17 {dimension_numbers = #tpu.dot_dimension_numbers<[1], [1], [0], [0], [0, 0, 1, 0], [], []>} : vector<2x32xbf16>, vector<16x32xbf16>, vector<2x16xf32> -> vector<2x16xf32>
    %38 = tpu.iota {dimensions = array<i32: 0>} : vector<2x16xi32>
    %39 = tpu.iota {dimensions = array<i32: 1>} : vector<2x16xi32>
    %c8_i32 = arith.constant 8 : i32
    %40 = vector.broadcast %c8_i32 : i32 to vector<2x16xi32>
    %41 = arith.muli %38, %40 : vector<2x16xi32>
    %42 = arith.cmpi sge, %39, %41 : vector<2x16xi32>
    %c8_i32_18 = arith.constant 8 : i32
    %43 = vector.broadcast %c8_i32_18 : i32 to vector<2x16xi32>
    %44 = arith.addi %41, %43 : vector<2x16xi32>
    %45 = arith.cmpi slt, %39, %44 : vector<2x16xi32>
    %46 = arith.andi %42, %45 : vector<2x16xi1>
    %cst_19 = arith.constant -1.000000e+30 : f32
    %47 = vector.broadcast %cst_19 : f32 to vector<2x16xf32>
    %48 = arith.select %46, %37, %47 : vector<2x16xi1>, vector<2x16xf32>
    %cst_20 = arith.constant dense<0xFF800000> : vector<2xf32>
    %49 = vector.multi_reduction <maximumf>, %48, %cst_20 [1] : vector<2x16xf32> to vector<2xf32>
    %50 = vector.shape_cast %49 : vector<2xf32> to vector<2x1xf32>
    %51 = vector.broadcast %50 : vector<2x1xf32> to vector<2x16xf32>
    %52 = arith.subf %48, %51 : vector<2x16xf32>
    %53 = math.exp %52 : vector<2x16xf32>
    %cst_21 = arith.constant dense<0.000000e+00> : vector<2xf32>
    %54 = vector.multi_reduction <add>, %53, %cst_21 [1] : vector<2x16xf32> to vector<2xf32>
    %55 = vector.shape_cast %54 : vector<2xf32> to vector<2x1xf32>
    %cst_22 = arith.constant 1.000000e+00 : f32
    %56 = vector.broadcast %cst_22 : f32 to vector<2x1xf32>
    %57 = arith.divf %56, %55 : vector<2x1xf32>
    %58 = vector.broadcast %57 : vector<2x1xf32> to vector<2x16xf32>
    %59 = arith.mulf %53, %58 : vector<2x16xf32>
    %60 = arith.truncf %59 : vector<2x16xf32> to vector<2x16xbf16>
    %cst_23 = arith.constant dense<0.000000e+00> : vector<2x32xf32>
    %61 = tpu.matmul %60, %1, %cst_23 {dimension_numbers = #tpu.dot_dimension_numbers<[1], [0], [0], [1], [0, 0, 1, 1], [], []>} : vector<2x16xbf16>, vector<16x32xbf16>, vector<2x32xf32> -> vector<2x32xf32>
    %62 = arith.mulf %61, %61 : vector<2x32xf32>
    %cst_24 = arith.constant dense<0.000000e+00> : vector<2xf32>
    %63 = vector.multi_reduction <add>, %62, %cst_24 [1] : vector<2x32xf32> to vector<2xf32>
    %64 = vector.shape_cast %63 : vector<2xf32> to vector<2x1xf32>
    %65 = math.sqrt %64 : vector<2x1xf32>
    %cst_25 = arith.constant 9.99999993E-9 : f32
    %66 = vector.broadcast %cst_25 : f32 to vector<2x1xf32>
    %67 = arith.addf %65, %66 : vector<2x1xf32>
    %68 = vector.broadcast %67 : vector<2x1xf32> to vector<2x32xf32>
    %69 = arith.divf %61, %68 : vector<2x32xf32>
    %c0_26 = arith.constant 0 : index
    %c0_27 = arith.constant 0 : index
    %70 = vector.load %arg7[%c0_26, %c0_27] : memref<2x32xf32, #tpu.memory_space<vmem>>, vector<2x32xf32>
    tpu.vector_store %arg7[%c0_26, %c0_27], %69 {strides = array<i32>} : memref<2x32xf32, #tpu.memory_space<vmem>>, vector<2x32xf32>,
    return
  }
  func.func @transform_0(%arg0: i32) -> (i32, i32) {
    %c0_i32 = arith.constant 0 : i32
    %c0_i32_0 = arith.constant 0 : i32
    return %arg0, %c0_i32 : i32, i32
  }
  func.func @transform_1(%arg0: i32) -> (i32, i32) {
    %c0_i32 = arith.constant 0 : i32
    %c0_i32_0 = arith.constant 0 : i32
    return %arg0, %c0_i32 : i32, i32
  }
  func.func @transform_2(%arg0: i32) -> (i32, i32) {
    %c0_i32 = arith.constant 0 : i32
    %c0_i32_0 = arith.constant 0 : i32
    %c0_i32_1 = arith.constant 0 : i32
    return %c0_i32, %c0_i32_0 : i32, i32
  }
  func.func @transform_3(%arg0: i32) -> (i32, i32) {
    %c0_i32 = arith.constant 0 : i32
    %c0_i32_0 = arith.constant 0 : i32
    %c0_i32_1 = arith.constant 0 : i32
    return %c0_i32, %c0_i32_0 : i32, i32
  }
  func.func @transform_4(%arg0: i32) -> (i32, i32) {
    %c0_i32 = arith.constant 0 : i32
    %c0_i32_0 = arith.constant 0 : i32
    %c0_i32_1 = arith.constant 0 : i32
    return %c0_i32, %c0_i32_0 : i32, i32
  }
  func.func @transform_5(%arg0: i32) -> (i32, i32) {
    %c0_i32 = arith.constant 0 : i32
    %c0_i32_0 = arith.constant 0 : i32
    %c0_i32_1 = arith.constant 0 : i32
    return %c0_i32, %c0_i32_0 : i32, i32
  }
  func.func @transform_6(%arg0: i32) -> (i32, i32) {
    %c0_i32 = arith.constant 0 : i32
    %c0_i32_0 = arith.constant 0 : i32
    return %arg0, %c0_i32 : i32, i32
  }
}

</mosaic_0001>

<llo_original>
// kernel: tpu_custom_call.1
$region0: #{tpu_custom_call.1}
  #allocation0 [shape = 'u32[]', space=smem, size = 0x4, offset = 0x4, fixed_abs, tag = 'smem constant byte address 0x4 - core index']
  #allocation1 [shape = 'u32[144,128]{1,0:T(1,128)}', space=vmem, size = 0x12000, scoped, tag = 'internal scratch']
  %s0 = inlined_call_operand.hbm [shape: f32[16,32], index: 0, kind: input, shape index: {}]
  %s1 = inlined_call_operand.hbm [shape: f32[2,32], index: 1, kind: input, shape index: {}]
  %s2 = inlined_call_operand.hbm [shape: bf16[32,32], index: 2, kind: input, shape index: {}]
  %s3 = inlined_call_operand.hbm [shape: f32[1,32], index: 3, kind: input, shape index: {}]
  %s4 = inlined_call_operand.hbm [shape: f32[1,32], index: 4, kind: input, shape index: {}]
  %s5 = inlined_call_operand.hbm [shape: f32[1,32], index: 5, kind: input, shape index: {}]
  %s6 = inlined_call_operand.hbm [shape: f32[2,32], index: 6, kind: output, shape index: {}]
  %s7 = sld [smem:[#allocation0]]
  $region58: #{tpu_custom_call.1} parent=0
    _
  %s9 = ssub.s32 1, %s7
  %s10 = scalar_select 0, %s9, %s7
  $region1: #{tpu_custom_call.1} parent=0
    #allocation2 [shape = 'u8[8192]{0}', space=vmem, size = 0x2000, scoped, tag = 'input window, operand 0, single buffered']
    #allocation3 [shape = 's32[1]{0}', space=sflag, size = 0x4, scoped, tag = 'scoped memory for tpu_custom_call.1']
    #allocation4 [shape = 's32[1]{0}', space=sflag, size = 0x4, scoped, tag = 'scoped memory for tpu_custom_call.1']
    #allocation5 [shape = 'u8[1024]{0}', space=vmem, size = 0x400, scoped, tag = 'input window, operand 1, single buffered']
    #allocation6 [shape = 's32[1]{0}', space=sflag, size = 0x4, scoped, tag = 'scoped memory for tpu_custom_call.1']
    #allocation7 [shape = 'u8[8192]{0}', space=vmem, size = 0x2000, scoped, tag = 'input window, operand 2, single buffered']
    #allocation8 [shape = 'u8[512]{0}', space=vmem, size = 0x400, scoped, tag = 'input window, operand 3, single buffered']
    #allocation9 [shape = 's32[1]{0}', space=sflag, size = 0x4, scoped, tag = 'scoped memory for tpu_custom_call.1']
    #allocation10 [shape = 'u8[512]{0}', space=vmem, size = 0x400, scoped, tag = 'input window, operand 4, single buffered']
    #allocation11 [shape = 'u8[512]{0}', space=vmem, size = 0x400, scoped, tag = 'input window, operand 5, single buffered']
    #allocation12 [shape = 's32[1]{0}', space=sflag, size = 0x4, scoped, tag = 'scoped memory for tpu_custom_call.1']
    #allocation13 [shape = 'u8[1024]{0}', space=vmem, size = 0x400, scoped, tag = 'output window, operand 0, single buffered']
    %11 = vsyncpa [#allocation3], 0
    %12 = vsyncpa [#allocation6], 0
    %13 = vsyncpa [#allocation9], 0
    %14 = vsyncpa [#allocation12], 0
    %15 = vsyncpa [#allocation4], 0
    // Predicated region
    $region2: #{tpu_custom_call.1} parent=1 // pred_check
      _
    $region3: #{tpu_custom_call.1} parent=1 // pred_check_branch
      %17 = sbr.rel (0) target = $region5
    $region4: #{tpu_custom_call.1} parent=1 // pred_region
      %s19 = ssub.s32 256, 256
      %20 = vsyncadd [#allocation3], %s19
      %s21 = sshll.u32 [#allocation2], 4
      %s22 = int_to_ptr.vmem [resolvable:$true] %s21
      %27 = dma.hbm_to_vmem [thread:$0]  %s0, 256, %s22, [#allocation3], 128, 128, 8
    $region5: #{tpu_custom_call.1} parent=1 // pred_fallthru
      _
    // Predicated region
    $region6: #{tpu_custom_call.1} parent=1 // pred_check
      _
    $region7: #{tpu_custom_call.1} parent=1 // pred_check_branch
      %29 = sbr.rel (0) target = $region9
    $region8: #{tpu_custom_call.1} parent=1 // pred_region
      %s31 = ssub.s32 32, 32
      %32 = vsyncadd [#allocation6], %s31
      %s34 = sshll.u32 [#allocation5], 4
      %s35 = int_to_ptr.vmem [resolvable:$true] %s34
      %37 = dma.hbm_to_vmem [thread:$0]  %s1, 32, %s35, [#allocation6]
    $region9: #{tpu_custom_call.1} parent=1 // pred_fallthru
      _
    // Predicated region
    $region10: #{tpu_custom_call.1} parent=1 // pred_check
      _
    $region11: #{tpu_custom_call.1} parent=1 // pred_check_branch
      %39 = sbr.rel (0) target = $region13
    $region12: #{tpu_custom_call.1} parent=1 // pred_region
      %s41 = ssub.s32 256, 256
      %42 = vsyncadd [#allocation6], %s41
      %s43 = sshll.u32 [#allocation7], 4
      %s44 = int_to_ptr.vmem [resolvable:$true] %s43
      %49 = dma.hbm_to_vmem [thread:$0]  %s2, 256, %s44, [#allocation6], 64, 64, 4
    $region13: #{tpu_custom_call.1} parent=1 // pred_fallthru
      _
    // Predicated region
    $region14: #{tpu_custom_call.1} parent=1 // pred_check
      _
    $region15: #{tpu_custom_call.1} parent=1 // pred_check_branch
      %51 = sbr.rel (0) target = $region17
    $region16: #{tpu_custom_call.1} parent=1 // pred_region
      %s53 = ssub.s32 16, 16
      %54 = vsyncadd [#allocation9], %s53
      %s56 = sshll.u32 [#allocation8], 4
      %s57 = int_to_ptr.vmem [resolvable:$true] %s56
      %59 = dma.hbm_to_vmem [thread:$0]  %s3, 16, %s57, [#allocation9]
    $region17: #{tpu_custom_call.1} parent=1 // pred_fallthru
      _
    // Predicated region
    $region18: #{tpu_custom_call.1} parent=1 // pred_check
      _
    $region19: #{tpu_custom_call.1} parent=1 // pred_check_branch
      %61 = sbr.rel (0) target = $region21
    $region20: #{tpu_custom_call.1} parent=1 // pred_region
      %s63 = ssub.s32 16, 16
      %64 = vsyncadd [#allocation9], %s63
      %s66 = sshll.u32 [#allocation10], 4
      %s67 = int_to_ptr.vmem [resolvable:$true] %s66
      %69 = dma.hbm_to_vmem [thread:$0]  %s4, 16, %s67, [#allocation9]
    $region21: #{tpu_custom_call.1} parent=1 // pred_fallthru
      _
    // Predicated region
    $region22: #{tpu_custom_call.1} parent=1 // pred_check
      _
    $region23: #{tpu_custom_call.1} parent=1 // pred_check_branch
      %71 = sbr.rel (0) target = $region25
    $region24: #{tpu_custom_call.1} parent=1 // pred_region
      %s73 = ssub.s32 16, 16
      %74 = vsyncadd [#allocation12], %s73
      %s76 = sshll.u32 [#allocation11], 4
      %s77 = int_to_ptr.vmem [resolvable:$true] %s76
      %79 = dma.hbm_to_vmem [thread:$0]  %s5, 16, %s77, [#allocation12]
    $region25: #{tpu_custom_call.1} parent=1 // pred_fallthru
      _
    // Predicated region
    $region26: #{tpu_custom_call.1} parent=1 // pred_check
      _
    $region27: #{tpu_custom_call.1} parent=1 // pred_check_branch
      %81 = sbr.rel (0) target = $region29
    $region28: #{tpu_custom_call.1} parent=1 // pred_region
      %82 = dma.done [#allocation3], 256
    $region29: #{tpu_custom_call.1} parent=1 // pred_fallthru
      _
    // Predicated region
    $region30: #{tpu_custom_call.1} parent=1 // pred_check
      _
    $region31: #{tpu_custom_call.1} parent=1 // pred_check_branch
      %84 = sbr.rel (0) target = $region33
    $region32: #{tpu_custom_call.1} parent=1 // pred_region
      %85 = dma.done [#allocation6], 32
    $region33: #{tpu_custom_call.1} parent=1 // pred_fallthru
      _
    // Predicated region
    $region34: #{tpu_custom_call.1} parent=1 // pred_check
      _
    $region35: #{tpu_custom_call.1} parent=1 // pred_check_branch
      %87 = sbr.rel (0) target = $region37
    $region36: #{tpu_custom_call.1} parent=1 // pred_region
      %88 = dma.done [#allocation6], 256
    $region37: #{tpu_custom_call.1} parent=1 // pred_fallthru
      _
    // Predicated region
    $region38: #{tpu_custom_call.1} parent=1 // pred_check
      _
    $region39: #{tpu_custom_call.1} parent=1 // pred_check_branch
      %90 = sbr.rel (0) target = $region41
    $region40: #{tpu_custom_call.1} parent=1 // pred_region
      %91 = dma.done [#allocation9], 16
    $region41: #{tpu_custom_call.1} parent=1 // pred_fallthru
      _
    // Predicated region
    $region42: #{tpu_custom_call.1} parent=1 // pred_check
      _
    $region43: #{tpu_custom_call.1} parent=1 // pred_check_branch
      %93 = sbr.rel (0) target = $region45
    $region44: #{tpu_custom_call.1} parent=1 // pred_region
      %94 = dma.done [#allocation9], 16
    $region45: #{tpu_custom_call.1} parent=1 // pred_fallthru
      _
    // Predicated region
    $region46: #{tpu_custom_call.1} parent=1 // pred_check
      _
    $region47: #{tpu_custom_call.1} parent=1 // pred_check_branch
      %96 = sbr.rel (0) target = $region49
    $region48: #{tpu_custom_call.1} parent=1 // pred_region
      %97 = dma.done [#allocation12], 16
    $region49: #{tpu_custom_call.1} parent=1 // pred_fallthru
      _
    %v99 = vld [vmem:[#allocation2] sm:$0xff]
    %v100 = vld [vmem:[#allocation2 + $0x8] sm:$0xff]
    %v101 = vpack.c.bf16 %v100, %v99
    %v102 = vld [vmem:[#allocation7] sm:$0xf]
    %v103 = vld [vmem:[#allocation7 + $0x4] sm:$0xf]
    %v104 = vld [vmem:[#allocation7 + $0x8] sm:$0xf]
    %v105 = vld [vmem:[#allocation7 + $0xc] sm:$0xf]
    %v106 = vld [vmem:[#allocation8] sm:$0x1]
    %v108 = vlaneseq
    %v109 = vshrl.u32 %v108, 7
    %v110 = vsub.s32 0, %v109
    %v111 = vrot.slane %v106, %v110
    %v117 = vunpack.c.l.b16 %v102
    %v118 = vunpack.c.l.b16 %v103
    %v119 = vunpack.c.l.b16 %v104
    %v120 = vunpack.c.l.b16 %v105
    %v121 = vpack.c.b16 %v118, %v117
    %v122 = vpack.c.b16 %v120, %v119
    %vm125 = vcmask 261120
    %v127 = vsel %vm125, %v101, 0
    %129 = vmatprep.subr.bf16.mxu0 0
    %130 = vmatpush1.bf16.msra.mxu0 %v121
    %131 = vmatprep.subr.bf16.mxu0 0
    %132 = vmatpush1.bf16.msra.mxu0 %v122
    %133 = vmatprep.subr.bf16.mxu0 0
    %134 = vmatpush1.bf16.msra.mxu0 0
    %135 = vmatprep.subr.bf16.mxu0 0
    %136 = vmatpush1.bf16.msra.mxu0 0
    %137 = vmatprep.subr.bf16.mxu0 0
    %138 = vmatpush1.bf16.msra.mxu0 0
    %139 = vmatprep.subr.bf16.mxu0 0
    %140 = vmatpush1.bf16.msra.mxu0 0
    %141 = vmatprep.subr.bf16.mxu0 0
    %142 = vmatpush1.bf16.msra.mxu0 0
    %143 = vmatprep.subr.bf16.mxu0 0
    %144 = vmatpush1.bf16.msra.mxu0 0
    %145 = vmatprep.subr.bf16.mxu0 0
    %146 = vmatpush1.bf16.msra.mxu0 0
    %147 = vmatprep.subr.bf16.mxu0 0
    %148 = vmatpush1.bf16.msra.mxu0 0
    %149 = vmatprep.subr.bf16.mxu0 0
    %150 = vmatpush1.bf16.msra.mxu0 0
    %151 = vmatprep.subr.bf16.mxu0 0
    %152 = vmatpush1.bf16.msra.mxu0 0
    %153 = vmatprep.subr.bf16.mxu0 0
    %154 = vmatpush1.bf16.msra.mxu0 0
    %155 = vmatprep.subr.bf16.mxu0 0
    %156 = vmatpush1.bf16.msra.mxu0 0
    %157 = vmatprep.subr.bf16.mxu0 0
    %158 = vmatpush1.bf16.msra.mxu0 0
    %159 = vmatprep.subr.bf16.mxu0 0
    %160 = vmatpush1.bf16.msra.mxu0 0
    %161 = vmatprep.mubr.bf16.mxu0 0
    %162 = vmatmul.mubr.bf16.gmra.mrb[0].mxu0 %v127
    %v163 = vpop.f32.mrb[0].mxu0
    %v164 = vadd.f32 %v111, %v163
    %v165 = vpop.f32.mrb[0].mxu0
    %v166 = vpop.f32.mrb[0].mxu0
    %v167 = vadd.f32 %v111, %v166
    %v168 = vpop.f32.mrb[0].mxu0
    %169 = vdwg.mxu0
    %v170 = vsel %vm125, %v164, 0.0
    %171 = vadd.xlane.f32.xlu0 %v170
    %v172 = vpop.xlane.xlu0 %171
    %v173 = vsel %vm125, %v167, 0.0
    %174 = vadd.xlane.f32.xlu0 %v173
    %v175 = vpop.xlane.xlu0 %174
    %v176 = vrcp.pop 32.0
    %v177 = vmul.f32 %v172, %v176
    %v178 = vmul.f32 %v175, %v176
    %v179 = vmul.f32 %v164, %v164
    %v180 = vmul.f32 %v167, %v167
    %v181 = vsel %vm125, %v179, 0.0
    %182 = vadd.xlane.f32.xlu0 %v181
    %v183 = vpop.xlane.xlu0 %182
    %v184 = vsel %vm125, %v180, 0.0
    %185 = vadd.xlane.f32.xlu0 %v184
    %v186 = vpop.xlane.xlu0 %185
    %v187 = vmul.f32 %v183, %v176
    %v188 = vmul.f32 %v186, %v176
    %v189 = vmul.f32 %v177, %v177
    %v190 = vmul.f32 %v178, %v178
    %v191 = vsub.f32 %v187, %v189
    %v192 = vsub.f32 %v188, %v190
    %v193 = vmax.f32 %v191, 0.0
    %v194 = vmax.f32 %v192, 0.0
    %v195 = vsub.f32 %v164, %v177
    %v196 = vsub.f32 %v167, %v178
    %v197 = vadd.f32 %v193, 1e-05
    %v198 = vadd.f32 %v194, 1e-05
    %v199 = vrsqrt.pop %v197
    %v200 = vrsqrt.pop %v198
    %v201 = vmul.f32 %v195, %v199
    %v202 = vmul.f32 %v196, %v200
    %v203 = vld [vmem:[#allocation10] sm:$0x1]
    %v205 = vlaneseq
    %v206 = vshrl.u32 %v205, 7
    %v207 = vsub.s32 0, %v206
    %v208 = vrot.slane %v203, %v207
    %v210 = vmul.f32 %v201, %v208
    %v211 = vmul.f32 %v202, %v208
    %v212 = vld [vmem:[#allocation11] sm:$0x1]
    %v214 = vlaneseq
    %v215 = vshrl.u32 %v214, 7
    %v216 = vsub.s32 0, %v215
    %v217 = vrot.slane %v212, %v216
    %v219 = vadd.f32 %v210, %v217
    %v220 = vadd.f32 %v211, %v217
    %v221 = vtanh.pop %v219
    %v222 = vtanh.pop %v220
    %v223 = vld [vmem:[#allocation5] sm:$0x3]
    %v224 = vpack.c.bf16 %v223, %v223
    %v225 = vpack.c.bf16 %v222, %v221
    %v227 = vsel %vm125, %v224, 0
    %v230 = vsel %vm125, %v225, 0
    %232 = vmatprep.subr.bf16.mxu0 0
    %233 = vmatpush1.bf16.xpose.msra.mxu0 %v230
    %234 = vmatprep.subr.bf16.mxu0 0
    %235 = vmatpush1.bf16.xpose.msra.mxu0 0
    %236 = vmatprep.subr.bf16.mxu0 0
    %237 = vmatpush1.bf16.xpose.msra.mxu0 0
    %238 = vmatprep.subr.bf16.mxu0 0
    %239 = vmatpush1.bf16.xpose.msra.mxu0 0
    %240 = vmatprep.subr.bf16.mxu0 0
    %241 = vmatpush1.bf16.xpose.msra.mxu0 0
    %242 = vmatprep.subr.bf16.mxu0 0
    %243 = vmatpush1.bf16.xpose.msra.mxu0 0
    %244 = vmatprep.subr.bf16.mxu0 0
    %245 = vmatpush1.bf16.xpose.msra.mxu0 0
    %246 = vmatprep.subr.bf16.mxu0 0
    %247 = vmatpush1.bf16.xpose.msra.mxu0 0
    %248 = vmatprep.subr.bf16.mxu0 0
    %249 = vmatpush1.bf16.xpose.msra.mxu0 0
    %250 = vmatprep.subr.bf16.mxu0 0
    %251 = vmatpush1.bf16.xpose.msra.mxu0 0
    %252 = vmatprep.subr.bf16.mxu0 0
    %253 = vmatpush1.bf16.xpose.msra.mxu0 0
    %254 = vmatprep.subr.bf16.mxu0 0
    %255 = vmatpush1.bf16.xpose.msra.mxu0 0
    %256 = vmatprep.subr.bf16.mxu0 0
    %257 = vmatpush1.bf16.xpose.msra.mxu0 0
    %258 = vmatprep.subr.bf16.mxu0 0
    %259 = vmatpush1.bf16.xpose.msra.mxu0 0
    %260 = vmatprep.subr.bf16.mxu0 0
    %261 = vmatpush1.bf16.xpose.msra.mxu0 0
    %262 = vmatprep.subr.bf16.mxu0 0
    %263 = vmatpush1.bf16.xpose.msra.mxu0 0
    %264 = vmatprep.mubr.bf16.mxu0 0
    %265 = vmatmul.mubr.bf16.gmra.mrb[0].mxu0 %v227
    %v266 = vpop.f32.mrb[0].mxu0
    %v267 = vadd.f32 0.0, %v266
    %v268 = vpop.f32.mrb[0].mxu0
    %v269 = vpop.f32.mrb[0].mxu0
    %v270 = vpop.f32.mrb[0].mxu0
    %271 = vdwg.mxu0
    %v272 = vlaneseq
    %v273 = vshrl.u32 %v272, 7
    %v274 = vlaneseq
    %v275 = vand.u32 %v274, 127
    %v276 = vmul.u32 %v273, 8
    %vm277 = vcmp.ge.s32.totalorder %v275, %v276
    %v278 = vadd.s32 %v276, 8
    %vm279 = vcmp.lt.s32.totalorder %v275, %v278
    %vm280 = vmand %vm277, %vm279
    %v281 = vsel %vm280, %v267, -1e+30
    %vm282 = vcmask 123904
    %v283 = vsel %vm282, %v281, -inf
    %284 = vmax.xlane.f32.xlu0 %v283
    %v285 = vpop.xlane.xlu0 %284
    %v286 = vsub.f32 %v281, %v285
    %v287 = vmul.f32 %v286, 1.442695
    %v288 = vpow.pop %v287
    %v289 = vsel %vm282, %v288, 0.0
    %290 = vadd.xlane.f32.xlu0 %v289
    %v291 = vpop.xlane.xlu0 %290
    %v292 = vrcp.pop %v291
    %v293 = vmul.f32 1.0, %v292
    %v294 = vmul.f32 %v288, %v293
    %v295 = vpack.c.bf16 %v294, %v294
    %vm296 = vcmask 130048
    %v298 = vsel %vm296, %v295, 0
    %300 = vmatprep.subr.bf16.mxu0 0
    %301 = vmatpush1.bf16.msra.mxu0 %v101
    %302 = vmatprep.subr.bf16.mxu0 0
    %303 = vmatpush1.bf16.msra.mxu0 0
    %304 = vmatprep.subr.bf16.mxu0 0
    %305 = vmatpush1.bf16.msra.mxu0 0
    %306 = vmatprep.subr.bf16.mxu0 0
    %307 = vmatpush1.bf16.msra.mxu0 0
    %308 = vmatprep.subr.bf16.mxu0 0
    %309 = vmatpush1.bf16.msra.mxu0 0
    %310 = vmatprep.subr.bf16.mxu0 0
    %311 = vmatpush1.bf16.msra.mxu0 0
    %312 = vmatprep.subr.bf16.mxu0 0
    %313 = vmatpush1.bf16.msra.mxu0 0
    %314 = vmatprep.subr.bf16.mxu0 0
    %315 = vmatpush1.bf16.msra.mxu0 0
    %316 = vmatprep.subr.bf16.mxu0 0
    %317 = vmatpush1.bf16.msra.mxu0 0
    %318 = vmatprep.subr.bf16.mxu0 0
    %319 = vmatpush1.bf16.msra.mxu0 0
    %320 = vmatprep.subr.bf16.mxu0 0
    %321 = vmatpush1.bf16.msra.mxu0 0
    %322 = vmatprep.subr.bf16.mxu0 0
    %323 = vmatpush1.bf16.msra.mxu0 0
    %324 = vmatprep.subr.bf16.mxu0 0
    %325 = vmatpush1.bf16.msra.mxu0 0
    %326 = vmatprep.subr.bf16.mxu0 0
    %327 = vmatpush1.bf16.msra.mxu0 0
    %328 = vmatprep.subr.bf16.mxu0 0
    %329 = vmatpush1.bf16.msra.mxu0 0
    %330 = vmatprep.subr.bf16.mxu0 0
    %331 = vmatpush1.bf16.msra.mxu0 0
    %332 = vmatprep.mubr.bf16.mxu0 0
    %333 = vmatmul.mubr.bf16.gmra.mrb[0].mxu0 %v298
    %v334 = vpop.f32.mrb[0].mxu0
    %v335 = vadd.f32 0.0, %v334
    %v336 = vpop.f32.mrb[0].mxu0
    %v337 = vpop.f32.mrb[0].mxu0
    %v338 = vpop.f32.mrb[0].mxu0
    %339 = vdwg.mxu0
    %v340 = vmul.f32 %v335, %v335
    %vm341 = vcmask 254976
    %v342 = vsel %vm341, %v340, 0.0
    %343 = vadd.xlane.f32.xlu0 %v342
    %v344 = vpop.xlane.xlu0 %343
    %v345 = vrsqrt.pop %v344
    %v346 = vmul.f32 %v344, %v345
    %vm347 = vcmp.eq.f32.partialorder %v344, inf
    %v348 = vsel %vm347, %v344, %v346
    %vm349 = vcmp.eq.f32.partialorder %v344, 0.0
    %v350 = vand.u32 %v344, 2147483648
    %v351 = vsel %vm349, %v350, %v348
    %v352 = vadd.f32 %v351, 1e-08
    %v353 = vrcp.pop %v352
    %v354 = vmul.f32 %v335, %v353
    %355 = vst.msk [vmem:[#allocation13] sm:$0x3] %vm341, %v354
    // Predicated region
    $region50: #{tpu_custom_call.1} parent=1 // pred_check
      _
    $region51: #{tpu_custom_call.1} parent=1 // pred_check_branch
      %357 = sbr.rel (0) target = $region53
    $region52: #{tpu_custom_call.1} parent=1 // pred_region
      %s359 = ssub.s32 32, 32
      %360 = vsyncadd [#allocation4], %s359
      %s362 = sshll.u32 [#allocation13], 4
      %s363 = int_to_ptr.vmem [resolvable:$true] %s362
      %365 = dma.vmem_to_hbm [thread:$0]  %s363, 32, %s6, [#allocation4]
    $region53: #{tpu_custom_call.1} parent=1 // pred_fallthru
      _
    // Predicated region
    $region54: #{tpu_custom_call.1} parent=1 // pred_check
      _
    $region55: #{tpu_custom_call.1} parent=1 // pred_check_branch
      %367 = sbr.rel (0) target = $region57
    $region56: #{tpu_custom_call.1} parent=1 // pred_region
      %368 = dma.done [#allocation4], 32
    $region57: #{tpu_custom_call.1} parent=1 // pred_fallthru
      _
    %369 = vsyncpa [#allocation3], 1
    %370 = vsyncpa [#allocation6], 1
    %371 = vsyncpa [#allocation9], 1
    %372 = vsyncpa [#allocation12], 1
    %373 = vsyncpa [#allocation4], 1

</llo_original>
